<compile_context>
chip_gen: v5e
topology: v5e:2x2
jax: 0.10.0
libtpu: 0.0.40
codegen_flags: <defaults>
</compile_context>

<pallas_src>
import functools

import jax
import jax.numpy as jnp
from jax.experimental import pallas as pl
from jax.experimental.pallas import tpu as pltpu

NPAD = 128  # padded logit lane width (unmasked vst)


# -------------------- Pallas kernel: the fused hot path --------------------
def _mm_clf_kernel(txt_ref, img_ref,        # (BT, H) bf16, (BT, C) bf16
                   wp_ref,                  # (H, H)  bf16   BERT pooler weight
                   w1t_ref,                 # (H, D1) bf16   clf Linear #1, text slice
                   wimg_ref,                # (C, D1) bf16   fused image path: wi @ w1i
                   wc_ref,                  # (D1, 128) bf16 final Linear (lane padded)
                   vec_ref,                 # (8, 128) f32   packed bias / BN vectors
                   out_ref,                 # (BT, 128) f32
                   *, H, D1):
    f32 = jnp.float32
    bf16 = jnp.bfloat16

    bp = vec_ref[0:1, :H]        # pooler bias
    bn_s = vec_ref[1:2, :D1]     # folded BN scale
    bn_b = vec_ref[2:3, :D1]     # folded BN shift (includes b1 and bi @ w1i)
    bc = vec_ref[3:4, :]         # final bias, 128-lane padded

    # --- text encoder tail: pooler (Linear + tanh), f32 accumulation ---
    txt = jnp.tanh(
        jnp.dot(txt_ref[...], wp_ref[...], preferred_element_type=f32) + bp)

    # --- concat([txt, img], -1) @ W1 + b1 (concat-free; image proj folded) ---
    h = (jnp.dot(txt.astype(bf16), w1t_ref[...], preferred_element_type=f32)
         + jnp.dot(img_ref[...], wimg_ref[...], preferred_element_type=f32))

    # --- BatchNorm1d (eval, folded affine) + ReLU; Dropout(eval) = identity ---
    h = jnp.maximum(h * bn_s + bn_b, 0.0)

    # --- final Linear -> lane-dense padded logits ---
    out_ref[...] = (jnp.dot(h.astype(bf16), wc_ref[...],
                            preferred_element_type=f32)
                    + bc).astype(out_ref.dtype)


# -------------------- one-time parameter preparation --------------------
def prepare_params(params):
    """Hoists all folds / padding / bf16 casts off the per-call path.

    Exact algebraic folds (eval mode):
      * image projection folded through clf Linear #1:  W_img = wi @ w1i
      * bias1 = b1 + bi @ w1i folded into the BatchNorm shift
      * final Linear padded to 128 output lanes (unmasked vst)
    """
    H = params["wp"].shape[0]
    D1 = params["w1t"].shape[-1]
    n_classes = params["wc"].shape[-1]
    assert H <= NPAD and D1 <= NPAD, (
        "packed (8,128) vector tile / single-block weight specs assume "
        "hidden_sz <= 128 and clf hidden <= 128; re-tile for larger sizes")

    w_img = params["wi"] @ params["w1i"]                           # (C, D1)
    bias1 = params["b1"] + params["bi"] @ params["w1i"]            # (1, D1)
    bn_s = params["bn_s"]
    bn_b = bias1 * bn_s + params["bn_b"]                           # b1 folded into BN shift

    wc_pad = jnp.zeros((D1, NPAD), jnp.float32).at[:, :n_classes].set(params["wc"])
    bc_pad = jnp.zeros((NPAD,), jnp.float32).at[:n_classes].set(params["bc"][0])

    # pack all small vectors into a single (8, 128) VMEM tile -> single DMA
    vecs = jnp.zeros((8, NPAD), jnp.float32)
    vecs = vecs.at[0, :H].set(params["bp"][0])
    vecs = vecs.at[1, :D1].set(bn_s[0])
    vecs = vecs.at[2, :D1].set(bn_b[0])
    vecs = vecs.at[3, :].set(bc_pad)

    bf16 = jnp.bfloat16
    return {
        "tok_emb": params["tok_emb"],
        "seg_emb": params["seg_emb"],
        "wp": params["wp"].astype(bf16),
        "w1t": params["w1t"].astype(bf16),
        "w_img": w_img.astype(bf16),
        "wc": wc_pad.astype(bf16),
        "vecs": vecs,
        "n_classes": n_classes,
    }


# -------------------- grid sizing --------------------
def _grid_params(B):
    """Pick (batch_tile, padded_batch).

    Small/medium batches -> one grid step (removes all per-step overhead;
    weights are resident anyway).  Large batches -> 256-row tiles (multiple of
    128 so the MXU M dimension is filled), preferring an even tile count so
    dimension_semantics=("parallel",) feeds both v7x TensorCores.  Tiny
    batches are never artificially split."""
    b8 = 8 * pl.cdiv(B, 8)                 # sublane-aligned batch
    if b8 <= 1024:
        return b8, b8                      # single grid step
    for tile in (256, 128):
        n = pl.cdiv(b8, tile)
        if n % 2 == 0:
            return tile, n * tile
    tile = 256
    return tile, pl.cdiv(b8, tile) * tile


# -------------------- per-call forward (jitted) --------------------
@functools.partial(jax.jit, static_argnames=("n_classes",))
def _forward_impl(txt, mask, segment, img, p, *, n_classes):
    # ---------------- XLA glue: embedding gather + pooling ----------------
    emb = p["tok_emb"][txt] + p["seg_emb"][segment]            # (B, S, H)
    m = mask.astype(jnp.float32)[..., None]                    # (B, S, 1)
    txt_feat = (jnp.sum(emb * m, axis=1)
                / jnp.maximum(jnp.sum(m, axis=1), 1.0))        # (B, H)
    img_feat = jnp.mean(img.astype(jnp.float32), axis=(2, 3))  # (B, C)  NCHW pool

    B = txt.shape[0]
    H = txt_feat.shape[-1]
    C = img_feat.shape[-1]
    D1 = p["w1t"].shape[-1]

    # ---------------- batch padding / bf16 activation casts ----------------
    bf16 = jnp.bfloat16
    batch_tile, b_pad = _grid_params(B)
    n_tiles = b_pad // batch_tile
    pad = b_pad - B
    txt_p = jnp.pad(txt_feat, ((0, pad), (0, 0))).astype(bf16)  # (B_pad, H)
    img_p = jnp.pad(img_feat, ((0, pad), (0, 0))).astype(bf16)  # (B_pad, C)

    flops = 2 * b_pad * (H * H + H * D1 + C * D1 + D1 * NPAD)
    bytes_accessed = (txt_p.size * 2 + img_p.size * 2
                      + (p["wp"].size + p["w1t"].size
                         + p["w_img"].size + p["wc"].size) * 2
                      + p["vecs"].size * 4 + b_pad * NPAD * 4)

    kernel = functools.partial(_mm_clf_kernel, H=H, D1=D1)

    out = pl.pallas_call(
        kernel,
        out_shape=jax.ShapeDtypeStruct((b_pad, NPAD), jnp.float32),
        grid_spec=pltpu.PrefetchScalarGridSpec(
            num_scalar_prefetch=0,
            grid=(n_tiles,),
            in_specs=[
                pl.BlockSpec((batch_tile, H), lambda i: (i, 0)),   # txt tile
                pl.BlockSpec((batch_tile, C), lambda i: (i, 0)),   # img tile
                pl.BlockSpec((H, H), lambda i: (0, 0)),            # resident weights
                pl.BlockSpec((H, D1), lambda i: (0, 0)),
                pl.BlockSpec((C, D1), lambda i: (0, 0)),
                pl.BlockSpec((D1, NPAD), lambda i: (0, 0)),
                pl.BlockSpec((8, NPAD), lambda i: (0, 0)),
            ],
            out_specs=pl.BlockSpec((batch_tile, NPAD), lambda i: (i, 0)),
        ),
        compiler_params=pltpu.CompilerParams(
            dimension_semantics=("parallel",),   # v7x: shard batch tiles across TCs
            vmem_limit_bytes=32 * 1024 * 1024,
        ),
        cost_estimate=pl.CostEstimate(
            flops=flops,
            transcendentals=b_pad * H,
            bytes_accessed=bytes_accessed,
        ),
    )(txt_p, img_p, p["wp"], p["w1t"], p["w_img"], p["wc"], p["vecs"])

    return out[:B, :n_classes]


def multimodal_concat_bert_clf(txt, mask, segment, img, prepared):
    """Forward pass. txt/mask/segment: (B, S) int; img: (B, C, H, W) NCHW."""
    n_classes = prepared["n_classes"]
    arrays = {k: v for k, v in prepared.items() if k != "n_classes"}
    return _forward_impl(txt, mask, segment, img, arrays, n_classes=n_classes)


# -------------------- deterministic parameter construction --------------------
def init_params(key, *, vocab=100, hidden_sz=32, img_channels=4,
                img_hidden_sz=16, num_image_embeds=4, hidden=(64,), n_classes=8):
    assert len(hidden) == 1, "script configured for a single clf hidden layer"
    d_img = img_hidden_sz * num_image_embeds
    d1 = hidden[0]
    ks = jax.random.split(key, 10)

    def w(k, shape, scale=0.05):
        return (scale * jax.random.normal(k, shape)).astype(jnp.float32)

    eps = 1e-5
    gamma = jnp.ones((1, d1), jnp.float32)
    beta = jnp.zeros((1, d1), jnp.float32)
    running_mean = jnp.zeros((1, d1), jnp.float32)
    running_var = jnp.ones((1, d1), jnp.float32)
    bn_s = gamma / jnp.sqrt(running_var + eps)
    bn_b = beta - running_mean * bn_s

    return {
        "tok_emb": w(ks[0], (vocab, hidden_sz)),
        "seg_emb": w(ks[1], (2, hidden_sz)),
        "wp": w(ks[2], (hidden_sz, hidden_sz)),
        "bp": jnp.zeros((1, hidden_sz), jnp.float32),
        "wi": w(ks[3], (img_channels, d_img)),
        "bi": jnp.zeros((1, d_img), jnp.float32),
        # clf Linear #1 on concat([txt, img]) of width hidden_sz + d_img,
        # stored pre-split along the input axis:
        "w1t": w(ks[4], (hidden_sz, d1)),
        "w1i": w(ks[5], (d_img, d1)),
        "b1": w(ks[6], (1, d1)),
        "bn_s": bn_s,
        "bn_b": bn_b,
        "wc": w(ks[7], (d1, n_classes)),
        "bc": w(ks[8], (1, n_classes)),
    }


if __name__ == "__main__":
    key = jax.random.PRNGKey(0)
    k_p, k_txt, k_seg, k_img = jax.random.split(key, 4)

    B, S = 2, 8
    C, HW = 4, 16
    params = init_params(k_p, vocab=100, hidden_sz=32, img_channels=C,
                         img_hidden_sz=16, num_image_embeds=4,
                         hidden=(64,), n_classes=8)
    prepared = prepare_params(params)          # one-time prep (off hot path)
    prepared = jax.tree_util.tree_map(
        lambda x: jax.block_until_ready(x) if isinstance(x, jax.Array) else x,
        prepared)

    txt = jax.random.randint(k_txt, (B, S), 0, 100, dtype=jnp.int32)
    mask = jnp.ones((B, S), jnp.int32)
    segment = jax.random.randint(k_seg, (B, S), 0, 2, dtype=jnp.int32)
    img = jax.random.normal(k_img, (B, C, HW, HW), jnp.float32)   # NCHW like PyTorch

    out = multimodal_concat_bert_clf(txt, mask, segment, img, prepared)
    out = jax.block_until_ready(out)
    assert out.shape == (B, 8) and out.dtype == jnp.float32
    assert bool(jnp.all(jnp.isfinite(out)))
    print("KERNEL_OK")
</pallas_src>

<mosaic_0001>
module attributes {stable_mosaic.version = 11 : i64} {
  func.func @_mm_clf_kernel(%arg0: i32, %arg1: memref<8x32xbf16, #tpu.memory_space<vmem>>, %arg2: memref<8x4xbf16, #tpu.memory_space<vmem>>, %arg3: memref<32x32xbf16, #tpu.memory_space<vmem>>, %arg4: memref<32x64xbf16, #tpu.memory_space<vmem>>, %arg5: memref<4x64xbf16, #tpu.memory_space<vmem>>, %arg6: memref<64x128xbf16, #tpu.memory_space<vmem>>, %arg7: memref<8x128xf32, #tpu.memory_space<vmem>>, %arg8: memref<8x128xf32, #tpu.memory_space<vmem>>) attributes {dimension_semantics = [#tpu.dimension_semantics<parallel>], iteration_bounds = array<i64: 1>, scalar_prefetch = 0 : i64, scratch_operands = 0 : i64, tpu.core_type = #tpu.core_type<tc>, window_params = [{transform_indices = @transform_0, window_bounds = array<i64: 8, 32>}, {transform_indices = @transform_1, window_bounds = array<i64: 8, 4>}, {pipeline_mode = #tpu.pipeline_mode<synchronous>, transform_indices = @transform_2, window_bounds = array<i64: 32, 32>}, {pipeline_mode = #tpu.pipeline_mode<synchronous>, transform_indices = @transform_3, window_bounds = array<i64: 32, 64>}, {pipeline_mode = #tpu.pipeline_mode<synchronous>, transform_indices = @transform_4, window_bounds = array<i64: 4, 64>}, {pipeline_mode = #tpu.pipeline_mode<synchronous>, transform_indices = @transform_5, window_bounds = array<i64: 64, 128>}, {pipeline_mode = #tpu.pipeline_mode<synchronous>, transform_indices = @transform_6, window_bounds = array<i64: 8, 128>}, {transform_indices = @transform_7, window_bounds = array<i64: 8, 128>}]} {
    %c0 = arith.constant 0 : index
    %c0_0 = arith.constant 0 : index
    %0 = vector.load %arg7[%c0, %c0_0] : memref<8x128xf32, #tpu.memory_space<vmem>>, vector<1x32xf32>
    %c1 = arith.constant 1 : index
    %c0_1 = arith.constant 0 : index
    %1 = vector.load %arg7[%c1, %c0_1] : memref<8x128xf32, #tpu.memory_space<vmem>>, vector<1x64xf32>
    %c2 = arith.constant 2 : index
    %c0_2 = arith.constant 0 : index
    %2 = vector.load %arg7[%c2, %c0_2] : memref<8x128xf32, #tpu.memory_space<vmem>>, vector<1x64xf32>
    %c3 = arith.constant 3 : index
    %c0_3 = arith.constant 0 : index
    %3 = vector.load %arg7[%c3, %c0_3] : memref<8x128xf32, #tpu.memory_space<vmem>>, vector<1x128xf32>
    %c0_4 = arith.constant 0 : index
    %c0_5 = arith.constant 0 : index
    %4 = vector.load %arg1[%c0_4, %c0_5] : memref<8x32xbf16, #tpu.memory_space<vmem>>, vector<8x32xbf16>
    %c0_6 = arith.constant 0 : index
    %c0_7 = arith.constant 0 : index
    %5 = vector.load %arg3[%c0_6, %c0_7] : memref<32x32xbf16, #tpu.memory_space<vmem>>, vector<32x32xbf16>
    %cst = arith.constant dense<0.000000e+00> : vector<8x32xf32>
    %6 = tpu.matmul %4, %5, %cst {dimension_numbers = #tpu.dot_dimension_numbers<[1], [0], [0], [1], [0, 0, 1, 1], [], []>} : vector<8x32xbf16>, vector<32x32xbf16>, vector<8x32xf32> -> vector<8x32xf32>
    %7 = vector.broadcast %0 : vector<1x32xf32> to vector<8x32xf32>
    %8 = arith.addf %6, %7 : vector<8x32xf32>
    %9 = math.tanh %8 : vector<8x32xf32>
    %10 = arith.truncf %9 : vector<8x32xf32> to vector<8x32xbf16>
    %c0_8 = arith.constant 0 : index
    %c0_9 = arith.constant 0 : index
    %11 = vector.load %arg4[%c0_8, %c0_9] : memref<32x64xbf16, #tpu.memory_space<vmem>>, vector<32x64xbf16>
    %cst_10 = arith.constant dense<0.000000e+00> : vector<8x64xf32>
    %12 = tpu.matmul %10, %11, %cst_10 {dimension_numbers = #tpu.dot_dimension_numbers<[1], [0], [0], [1], [0, 0, 1, 1], [], []>} : vector<8x32xbf16>, vector<32x64xbf16>, vector<8x64xf32> -> vector<8x64xf32>
    %c0_11 = arith.constant 0 : index
    %c0_12 = arith.constant 0 : index
    %13 = vector.load %arg2[%c0_11, %c0_12] : memref<8x4xbf16, #tpu.memory_space<vmem>>, vector<8x4xbf16>
    %c0_13 = arith.constant 0 : index
    %c0_14 = arith.constant 0 : index
    %14 = vector.load %arg5[%c0_13, %c0_14] : memref<4x64xbf16, #tpu.memory_space<vmem>>, vector<4x64xbf16>
    %cst_15 = arith.constant dense<0.000000e+00> : vector<8x64xf32>
    %15 = tpu.matmul %13, %14, %cst_15 {dimension_numbers = #tpu.dot_dimension_numbers<[1], [0], [0], [1], [0, 0, 1, 1], [], []>} : vector<8x4xbf16>, vector<4x64xbf16>, vector<8x64xf32> -> vector<8x64xf32>
    %16 = arith.addf %12, %15 : vector<8x64xf32>
    %17 = vector.broadcast %1 : vector<1x64xf32> to vector<8x64xf32>
    %18 = arith.mulf %16, %17 : vector<8x64xf32>
    %19 = vector.broadcast %2 : vector<1x64xf32> to vector<8x64xf32>
    %20 = arith.addf %18, %19 : vector<8x64xf32>
    %cst_16 = arith.constant 0.000000e+00 : f32
    %21 = vector.broadcast %cst_16 : f32 to vector<8x64xf32>
    %22 = arith.maximumf %20, %21 : vector<8x64xf32>
    %23 = arith.truncf %22 : vector<8x64xf32> to vector<8x64xbf16>
    %c0_17 = arith.constant 0 : index
    %c0_18 = arith.constant 0 : index
    %24 = vector.load %arg6[%c0_17, %c0_18] : memref<64x128xbf16, #tpu.memory_space<vmem>>, vector<64x128xbf16>
    %cst_19 = arith.constant dense<0.000000e+00> : vector<8x128xf32>
    %25 = tpu.matmul %23, %24, %cst_19 {dimension_numbers = #tpu.dot_dimension_numbers<[1], [0], [0], [1], [0, 0, 1, 1], [], []>} : vector<8x64xbf16>, vector<64x128xbf16>, vector<8x128xf32> -> vector<8x128xf32>
    %26 = vector.broadcast %3 : vector<1x128xf32> to vector<8x128xf32>
    %27 = arith.addf %25, %26 : vector<8x128xf32>
    %c0_20 = arith.constant 0 : index
    %c0_21 = arith.constant 0 : index
    %28 = vector.load %arg8[%c0_20, %c0_21] : memref<8x128xf32, #tpu.memory_space<vmem>>, vector<8x128xf32>
    tpu.vector_store %arg8[%c0_20, %c0_21], %27 {strides = array<i32>} : memref<8x128xf32, #tpu.memory_space<vmem>>, vector<8x128xf32>,
    return
  }
  func.func @transform_0(%arg0: i32) -> (i32, i32) {
    %c0_i32 = arith.constant 0 : i32
    %c0_i32_0 = arith.constant 0 : i32
    return %arg0, %c0_i32 : i32, i32
  }
  func.func @transform_1(%arg0: i32) -> (i32, i32) {
    %c0_i32 = arith.constant 0 : i32
    %c0_i32_0 = arith.constant 0 : i32
    return %arg0, %c0_i32 : i32, i32
  }
  func.func @transform_2(%arg0: i32) -> (i32, i32) {
    %c0_i32 = arith.constant 0 : i32
    %c0_i32_0 = arith.constant 0 : i32
    %c0_i32_1 = arith.constant 0 : i32
    return %c0_i32, %c0_i32_0 : i32, i32
  }
  func.func @transform_3(%arg0: i32) -> (i32, i32) {
    %c0_i32 = arith.constant 0 : i32
    %c0_i32_0 = arith.constant 0 : i32
    %c0_i32_1 = arith.constant 0 : i32
    return %c0_i32, %c0_i32_0 : i32, i32
  }
  func.func @transform_4(%arg0: i32) -> (i32, i32) {
    %c0_i32 = arith.constant 0 : i32
    %c0_i32_0 = arith.constant 0 : i32
    %c0_i32_1 = arith.constant 0 : i32
    return %c0_i32, %c0_i32_0 : i32, i32
  }
  func.func @transform_5(%arg0: i32) -> (i32, i32) {
    %c0_i32 = arith.constant 0 : i32
    %c0_i32_0 = arith.constant 0 : i32
    %c0_i32_1 = arith.constant 0 : i32
    return %c0_i32, %c0_i32_0 : i32, i32
  }
  func.func @transform_6(%arg0: i32) -> (i32, i32) {
    %c0_i32 = arith.constant 0 : i32
    %c0_i32_0 = arith.constant 0 : i32
    %c0_i32_1 = arith.constant 0 : i32
    return %c0_i32, %c0_i32_0 : i32, i32
  }
  func.func @transform_7(%arg0: i32) -> (i32, i32) {
    %c0_i32 = arith.constant 0 : i32
    %c0_i32_0 = arith.constant 0 : i32
    return %arg0, %c0_i32 : i32, i32
  }
}

</mosaic_0001>

<llo_original>
// kernel: _forward_impl.1
$region0: #{_forward_impl.1}
  #allocation0 [shape = 'u32[]', space=smem, size = 0x4, offset = 0x4, fixed_abs, tag = 'smem constant byte address 0x4 - core index']
  #allocation1 [shape = 'u32[72,128]{1,0:T(1,128)}', space=vmem, size = 0x9000, scoped, tag = 'internal scratch']
  %s0 = inlined_call_operand.vmem [shape: bf16[8,32], index: 0, kind: input, shape index: {}]
  %s1 = inlined_call_operand.vmem [shape: bf16[8,4], index: 1, kind: input, shape index: {}]
  %s2 = inlined_call_operand.vmem [shape: bf16[32,32], index: 2, kind: input, shape index: {}]
  %s3 = inlined_call_operand.vmem [shape: bf16[32,64], index: 3, kind: input, shape index: {}]
  %s4 = inlined_call_operand.vmem [shape: bf16[4,64], index: 4, kind: input, shape index: {}]
  %s5 = inlined_call_operand.vmem [shape: bf16[64,128], index: 5, kind: input, shape index: {}]
  %s6 = inlined_call_operand.vmem [shape: f32[8,128], index: 6, kind: input, shape index: {}]
  %s7 = inlined_call_operand.vmem [shape: f32[8,128], index: 7, kind: output, shape index: {}]
  %s8 = sld [smem:[#allocation0]]
  $region38: #{_forward_impl.1} parent=0
    _
  %s10 = ssub.s32 1, %s8
  %s11 = scalar_select 0, %s10, %s8
  // Predicated region
  $region2: #{_forward_impl.1} parent=0 // pred_check
    _
  $region3: #{_forward_impl.1} parent=0 // pred_check_branch
    %13 = sbr.rel (0) target = $region5
  $region4: #{_forward_impl.1} parent=0 // pred_region
    _
  $region5: #{_forward_impl.1} parent=0 // pred_fallthru
    _
  // Predicated region
  $region6: #{_forward_impl.1} parent=0 // pred_check
    _
  $region7: #{_forward_impl.1} parent=0 // pred_check_branch
    %15 = sbr.rel (0) target = $region9
  $region8: #{_forward_impl.1} parent=0 // pred_region
    _
  $region9: #{_forward_impl.1} parent=0 // pred_fallthru
    _
  // Predicated region
  $region10: #{_forward_impl.1} parent=0 // pred_check
    _
  $region11: #{_forward_impl.1} parent=0 // pred_check_branch
    %17 = sbr.rel (0) target = $region13
  $region12: #{_forward_impl.1} parent=0 // pred_region
    _
  $region13: #{_forward_impl.1} parent=0 // pred_fallthru
    _
  // Predicated region
  $region14: #{_forward_impl.1} parent=0 // pred_check
    _
  $region15: #{_forward_impl.1} parent=0 // pred_check_branch
    %19 = sbr.rel (0) target = $region17
  $region16: #{_forward_impl.1} parent=0 // pred_region
    _
  $region17: #{_forward_impl.1} parent=0 // pred_fallthru
    _
  // Predicated region
  $region18: #{_forward_impl.1} parent=0 // pred_check
    _
  $region19: #{_forward_impl.1} parent=0 // pred_check_branch
    %21 = sbr.rel (0) target = $region21
  $region20: #{_forward_impl.1} parent=0 // pred_region
    _
  $region21: #{_forward_impl.1} parent=0 // pred_fallthru
    _
  // Predicated region
  $region22: #{_forward_impl.1} parent=0 // pred_check
    _
  $region23: #{_forward_impl.1} parent=0 // pred_check_branch
    %23 = sbr.rel (0) target = $region25
  $region24: #{_forward_impl.1} parent=0 // pred_region
    _
  $region25: #{_forward_impl.1} parent=0 // pred_fallthru
    _
  // Predicated region
  $region26: #{_forward_impl.1} parent=0 // pred_check
    _
  $region27: #{_forward_impl.1} parent=0 // pred_check_branch
    %25 = sbr.rel (0) target = $region29
  $region28: #{_forward_impl.1} parent=0 // pred_region
    _
  $region29: #{_forward_impl.1} parent=0 // pred_fallthru
    _
  %v27 = vld [vmem:[%s6] sm:$0x1]
  %v28 = vld [vmem:[%s6 + $0x1] sm:$0x1]
  %v29 = vld [vmem:[%s6 + $0x2] sm:$0x1]
  %v30 = vld [vmem:[%s6 + $0x3] sm:$0x1]
  %v31 = vld [vmem:[%s0] sm:$0xf]
  %v32 = vld [vmem:[%s2] sm:$0xf]
  %v33 = vld [vmem:[%s2 + $0x4] sm:$0xf]
  %v34 = vld [vmem:[%s2 + $0x8] sm:$0xf]
  %v35 = vld [vmem:[%s2 + $0xc] sm:$0xf]
  %v36 = vperm.slane %v27, 0
  %v41 = vunpack.c.l.b16 %v32
  %v42 = vunpack.c.l.b16 %v33
  %v43 = vunpack.c.l.b16 %v34
  %v44 = vunpack.c.l.b16 %v35
  %v45 = vpack.c.b16 %v42, %v41
  %v46 = vpack.c.b16 %v44, %v43
  %vm49 = vcmask 261120
  %v51 = vsel %vm49, %v31, 0
  %53 = vmatpush.bf16.msra.mxu0 0
  %54 = vmatpush.bf16.msra.mxu0 0
  %55 = vmatpush.bf16.msra.mxu0 0
  %56 = vmatpush.bf16.msra.mxu0 0
  %57 = vmatpush.bf16.msra.mxu0 0
  %58 = vmatpush.bf16.msra.mxu0 0
  %59 = vmatpush.bf16.msra.mxu0 %v46
  %60 = vmatpush.bf16.msra.mxu0 %v45
  %61 = vmatmul.bf16.gmra.mxu0 %v51
  %v62 = vpop.f32.mrf.mxu0
  %v63 = vadd.f32 %v36, %v62
  %v64 = vpop.f32.mrf.mxu0
  %65 = vdwg.mxu0
  %v66 = vtanh.pop %v63
  %v67 = vpack.c.bf16 %v66, %v66
  %v68 = vld [vmem:[%s3] sm:$0xf]
  %v69 = vld [vmem:[%s3 + $0x4] sm:$0xf]
  %v70 = vld [vmem:[%s3 + $0x8] sm:$0xf]
  %v71 = vld [vmem:[%s3 + $0xc] sm:$0xf]
  %v72 = vld [vmem:[%s1] sm:$0xf]
  %v73 = vld [vmem:[%s4] sm:$0x3]
  %vm74 = vcmask 31744
  %v76 = vsel %vm74, %v72, 0
  %vm78 = vcmask 1041408
  %v80 = vsel %vm78, %v73, 0
  %82 = vmatpush.bf16.msra.mxu0 0
  %83 = vmatpush.bf16.msra.mxu0 0
  %84 = vmatpush.bf16.msra.mxu0 0
  %85 = vmatpush.bf16.msra.mxu0 0
  %86 = vmatpush.bf16.msra.mxu0 0
  %87 = vmatpush.bf16.msra.mxu0 0
  %88 = vmatpush.bf16.msra.mxu0 0
  %89 = vmatpush.bf16.msra.mxu0 %v80
  %90 = vmatmul.bf16.gmra.mxu0 %v76
  %v91 = vpop.f32.mrf.mxu0
  %v92 = vadd.f32 0.0, %v91
  %v93 = vpop.f32.mrf.mxu0
  %94 = vdwg.mxu0
  %v99 = vunpack.c.l.b16 %v68
  %v100 = vunpack.c.l.b16 %v69
  %v101 = vunpack.c.l.b16 %v70
  %v102 = vunpack.c.l.b16 %v71
  %v103 = vpack.c.b16 %v100, %v99
  %v104 = vpack.c.b16 %v102, %v101
  %v108 = vsel %vm49, %v67, 0
  %110 = vmatpush.bf16.msra.mxu0 0
  %111 = vmatpush.bf16.msra.mxu0 0
  %112 = vmatpush.bf16.msra.mxu0 0
  %113 = vmatpush.bf16.msra.mxu0 0
  %114 = vmatpush.bf16.msra.mxu0 0
  %115 = vmatpush.bf16.msra.mxu0 0
  %116 = vmatpush.bf16.msra.mxu0 %v104
  %117 = vmatpush.bf16.msra.mxu0 %v103
  %118 = vmatmul.bf16.gmra.mxu0 %v108
  %v119 = vpop.f32.mrf.mxu0
  %v120 = vadd.f32 %v92, %v119
  %v121 = vpop.f32.mrf.mxu0
  %122 = vdwg.mxu0
  %v123 = vperm.slane %v28, 0
  %v124 = vmul.f32 %v120, %v123
  %v125 = vperm.slane %v29, 0
  %v126 = vadd.f32 %v124, %v125
  %v127 = vmax.f32 %v126, 0.0
  %v128 = vpack.c.bf16 %v127, %v127
  %v129 = vld [vmem:[%s5] sm:$0xf]
  %v130 = vld [vmem:[%s5 + $0x4] sm:$0xf]
  %v131 = vld [vmem:[%s5 + $0x8] sm:$0xf]
  %v132 = vld [vmem:[%s5 + $0xc] sm:$0xf]
  %v133 = vld [vmem:[%s5 + $0x10] sm:$0xf]
  %v134 = vld [vmem:[%s5 + $0x14] sm:$0xf]
  %v135 = vld [vmem:[%s5 + $0x18] sm:$0xf]
  %v136 = vld [vmem:[%s5 + $0x1c] sm:$0xf]
  %v137 = vperm.slane %v30, 0
  %v146 = vunpack.c.l.b16 %v129
  %v147 = vunpack.c.l.b16 %v130
  %v148 = vunpack.c.l.b16 %v131
  %v149 = vunpack.c.l.b16 %v132
  %v150 = vunpack.c.l.b16 %v133
  %v151 = vunpack.c.l.b16 %v134
  %v152 = vunpack.c.l.b16 %v135
  %v153 = vunpack.c.l.b16 %v136
  %v154 = vpack.c.b16 %v147, %v146
  %v155 = vpack.c.b16 %v149, %v148
  %v156 = vpack.c.b16 %v151, %v150
  %v157 = vpack.c.b16 %v153, %v152
  %vm162 = vcmask 523264
  %v164 = vsel %vm162, %v128, 0
  %166 = vmatpush.bf16.msra.mxu0 0
  %167 = vmatpush.bf16.msra.mxu0 0
  %168 = vmatpush.bf16.msra.mxu0 0
  %169 = vmatpush.bf16.msra.mxu0 0
  %170 = vmatpush.bf16.msra.mxu0 %v157
  %171 = vmatpush.bf16.msra.mxu0 %v156
  %172 = vmatpush.bf16.msra.mxu0 %v155
  %173 = vmatpush.bf16.msra.mxu0 %v154
  %174 = vmatmul.bf16.gmra.mxu0 %v164
  %v175 = vpop.f32.mrf.mxu0
  %v176 = vadd.f32 %v137, %v175
  %v177 = vpop.f32.mrf.mxu0
  %178 = vdwg.mxu0
  %179 = vst [vmem:[%s7] sm:$0xff] %v176
  // Predicated region
  $region30: #{_forward_impl.1} parent=0 // pred_check
    _
  $region31: #{_forward_impl.1} parent=0 // pred_check_branch
    %181 = sbr.rel (0) target = $region33
  $region32: #{_forward_impl.1} parent=0 // pred_region
    _
  $region33: #{_forward_impl.1} parent=0 // pred_fallthru
    _
  // Predicated region
  $region34: #{_forward_impl.1} parent=0 // pred_check
    _
  $region35: #{_forward_impl.1} parent=0 // pred_check_branch
    %183 = sbr.rel (0) target = $region37
  $region36: #{_forward_impl.1} parent=0 // pred_region
    _
  $region37: #{_forward_impl.1} parent=0 // pred_fallthru
    _

</llo_original>
